<compile_context>
chip_gen: v6e
topology: v6e:2x2x1
jax: 0.10.0
libtpu: 0.0.40
codegen_flags: <defaults>
</compile_context>

<pallas_src>
import jax
import jax.numpy as jnp
from jax.experimental import pallas as pl
from jax.experimental.pallas import tpu as pltpu


def simclr_head_kernel(x_ref, w_ref, b_ref, o_ref, acc_ref):
    # TODO(synk): the real SSAST backbone (transformer encoder) is an injected
    # module and not translatable here; its 'ft_cls' pooling is approximated
    # as a mean over the patch-token axis (the 1/S is folded into the weight).
    s = pl.program_id(1)

    @pl.when(s == 0)
    def _init():
        acc_ref[...] = jnp.zeros_like(acc_ref)

    # Per-chunk work: fused widening sum over this S-chunk into the persistent
    # f32 pooled-sum accumulator (no explicit .astype -> no 2x f32 temp tile).
    acc_ref[...] += jnp.sum(x_ref[...], axis=1, dtype=jnp.float32)      # (tb, E)

    @pl.when(s == pl.num_programs(1) - 1)
    def _finalize():
        # Single projection matmul per batch tile: bf16 inputs on the MXU,
        # f32 result, bias fused into the epilogue (weight already carries 1/S).
        pooled = acc_ref[...].astype(w_ref.dtype)                        # (tb, E)
        o_ref[...] = (jnp.dot(pooled, w_ref[...],
                              preferred_element_type=jnp.float32)
                      + b_ref[...]).astype(o_ref.dtype)                  # (tb, Dp)


def prepare_params(w_torch, bias, seq_len, *, lane=128, dtype=jnp.bfloat16):
    """One-time parameter prep (NOT per forward):
       - transpose PyTorch Linear weight (D, E) -> (E, D)
       - fold the 1/S of the mean-pool into the weight
       - zero-pad the output dim to a lane-dense multiple of 128
       - cast the weight to bf16 for the MXU."""
    D, E = w_torch.shape
    Dp = ((D + lane - 1) // lane) * lane
    w = (w_torch.T / seq_len).astype(dtype)                   # (E, D)
    w = jnp.pad(w, ((0, 0), (0, Dp - D)))                     # (E, Dp)
    b = jnp.pad(bias.astype(jnp.float32), (0, Dp - D)).reshape(1, Dp)
    return w, b, D


def simclr_head(x, w_padded, b_padded, out_dim, *, tb=128, ts=32):
    """Mean-pool over the token axis + Linear projection (SimCLRHead forward).

    Tile guidance: tb=128..256, ts=32..128 (sweep).  Keep the x double-buffer
    (2*tb*ts*E*itemsize) <= ~24 MiB on v7x (64 MiB VMEM/TC); larger on
    v5e/v6e (128 MiB).  For v7x megacore choose tb so that B // tb >= 2.
    """
    B, S, E = x.shape
    E2, Dp = w_padded.shape
    tb = min(tb, B)
    ts = min(ts, S)
    assert E == E2 and B % tb == 0 and S % ts == 0

    # Derive the scoped-VMEM limit from the actual footprint (double-buffered
    # streams + resident weight/bias + f32 accumulator) so the same code fits
    # v7x's 64 MiB part and still allows big tiles on v5e/v6e.
    vmem_bytes = (2 * tb * ts * E * x.dtype.itemsize          # x double-buffer
                  + 2 * E * Dp * w_padded.dtype.itemsize      # weight buffers
                  + 2 * Dp * 4                                # bias buffers
                  + 2 * tb * Dp * 4                           # out double-buffer
                  + tb * E * 4)                               # pooled-sum scratch
    vmem_limit = int(min(max(vmem_bytes * 5 // 4 + (1 << 20), 16 << 20), 96 << 20))

    cost = pl.CostEstimate(
        flops=2 * B * E * Dp + B * S * E,   # one matmul per pooled row + the pooled sum
        transcendentals=0,
        bytes_accessed=(x.size * x.dtype.itemsize
                        + w_padded.size * w_padded.dtype.itemsize
                        + b_padded.size * 4
                        + B * Dp * 4),
    )

    out = pl.pallas_call(
        simclr_head_kernel,
        out_shape=jax.ShapeDtypeStruct((B, Dp), jnp.float32),
        grid_spec=pltpu.PrefetchScalarGridSpec(
            num_scalar_prefetch=0,
            grid=(B // tb, S // ts),
            in_specs=[
                pl.BlockSpec((tb, ts, E), lambda i, s: (i, s, 0)),  # x: streamed tiles
                pl.BlockSpec((E, Dp), lambda i, s: (0, 0)),         # weight (grid-invariant)
                pl.BlockSpec((1, Dp), lambda i, s: (0, 0)),         # bias (grid-invariant)
            ],
            out_specs=pl.BlockSpec((tb, Dp), lambda i, s: (i, 0)),  # ignores the S axis
            scratch_shapes=[pltpu.VMEM((tb, E), jnp.float32)],      # pooled-sum accumulator
        ),
        compiler_params=pltpu.CompilerParams(
            dimension_semantics=("parallel", "arbitrary"),
            vmem_limit_bytes=vmem_limit,
        ),
        cost_estimate=cost,
    )(x, w_padded, b_padded)

    return out[:, :out_dim]  # strip the lane padding


if __name__ == "__main__":
    # Small deterministic shapes consistent with the module:
    # batch=16 clips, 32 patch tokens, embeddings_dim=128, output_dim=16.
    B, S, E, D = 16, 32, 128, 16

    key = jax.random.PRNGKey(0)
    kx, kw, kb = jax.random.split(key, 3)
    x = jax.random.normal(kx, (B, S, E), dtype=jnp.float32)
    # nn.Linear(E, D) parameters in PyTorch layout (out_features, in_features).
    w_torch = jax.random.normal(kw, (D, E), dtype=jnp.float32) * 0.02
    bias = jax.random.normal(kb, (D,), dtype=jnp.float32) * 0.02

    # One-time parameter conversion (1/S fold + lane pad + bf16 cast).
    w_p, b_p, out_dim = prepare_params(w_torch, bias, seq_len=S)

    # Small tiles here purely to exercise the multi-step reduction (grid (2,4));
    # realistic shapes use the tb=128 / ts=32 defaults.
    out = jax.block_until_ready(simclr_head(x, w_p, b_p, out_dim, tb=8, ts=8))

    # Reference (same math as the PyTorch forward), f32.
    ref = jnp.mean(x, axis=1) @ w_torch.T + bias
    assert out.shape == (B, D)
    assert jnp.allclose(out, ref, atol=1e-2, rtol=1e-2), (
        float(jnp.max(jnp.abs(out - ref))))

    print("KERNEL_OK")
</pallas_src>

<mosaic_0001>
module attributes {stable_mosaic.version = 11 : i64} {
  func.func @simclr_head_kernel(%arg0: i32, %arg1: i32, %arg2: memref<8x8x128xf32, #tpu.memory_space<vmem>>, %arg3: memref<128x128xbf16, #tpu.memory_space<vmem>>, %arg4: memref<1x128xf32, #tpu.memory_space<vmem>>, %arg5: memref<8x128xf32, #tpu.memory_space<vmem>>, %arg6: memref<8x128xf32, #tpu.memory_space<vmem>>) attributes {dimension_semantics = [#tpu.dimension_semantics<parallel>, #tpu.dimension_semantics<arbitrary>], iteration_bounds = array<i64: 2, 4>, scalar_prefetch = 0 : i64, scratch_operands = 1 : i64, tpu.core_type = #tpu.core_type<tc>, window_params = [{transform_indices = @transform_0, window_bounds = array<i64: 8, 8, 128>}, {pipeline_mode = #tpu.pipeline_mode<synchronous>, transform_indices = @transform_1, window_bounds = array<i64: 128, 128>}, {pipeline_mode = #tpu.pipeline_mode<synchronous>, transform_indices = @transform_2, window_bounds = array<i64: 1, 128>}, {transform_indices = @transform_3, window_bounds = array<i64: 8, 128>}]} {
    %c0_i32 = arith.constant 0 : i32
    %0 = arith.cmpi eq, %arg1, %c0_i32 : i32
    %1 = arith.extui %0 : i1 to i32
    %c0_i32_0 = arith.constant 0 : i32
    %2 = arith.cmpi ne, %1, %c0_i32_0 : i32
    scf.if %2 {
      %cst_8 = arith.constant 0.000000e+00 : f32
      %11 = vector.broadcast %cst_8 : f32 to vector<8x128xf32>
      %c0_9 = arith.constant 0 : index
      %c0_10 = arith.constant 0 : index
      %12 = vector.load %arg6[%c0_9, %c0_10] : memref<8x128xf32, #tpu.memory_space<vmem>>, vector<8x128xf32>
      tpu.vector_store %arg6[%c0_9, %c0_10], %11 {strides = array<i32>} : memref<8x128xf32, #tpu.memory_space<vmem>>, vector<8x128xf32>,
    } else {
    }
    %c0 = arith.constant 0 : index
    %c0_1 = arith.constant 0 : index
    %3 = vector.load %arg6[%c0, %c0_1] : memref<8x128xf32, #tpu.memory_space<vmem>>, vector<8x128xf32>
    %c0_2 = arith.constant 0 : index
    %c0_3 = arith.constant 0 : index
    %c0_4 = arith.constant 0 : index
    %4 = vector.load %arg2[%c0_2, %c0_3, %c0_4] : memref<8x8x128xf32, #tpu.memory_space<vmem>>, vector<8x8x128xf32>
    %cst = arith.constant dense<0.000000e+00> : vector<8x128xf32>
    %5 = vector.multi_reduction <add>, %4, %cst [1] : vector<8x8x128xf32> to vector<8x128xf32>
    %6 = arith.addf %3, %5 : vector<8x128xf32>
    %c0_5 = arith.constant 0 : index
    %c0_6 = arith.constant 0 : index
    %7 = vector.load %arg6[%c0_5, %c0_6] : memref<8x128xf32, #tpu.memory_space<vmem>>, vector<8x128xf32>
    tpu.vector_store %arg6[%c0_5, %c0_6], %6 {strides = array<i32>} : memref<8x128xf32, #tpu.memory_space<vmem>>, vector<8x128xf32>,
    %c3_i32 = arith.constant 3 : i32
    %8 = arith.cmpi eq, %arg1, %c3_i32 : i32
    %9 = arith.extui %8 : i1 to i32
    %c0_i32_7 = arith.constant 0 : i32
    %10 = arith.cmpi ne, %9, %c0_i32_7 : i32
    scf.if %10 {
      %c0_8 = arith.constant 0 : index
      %c0_9 = arith.constant 0 : index
      %11 = vector.load %arg6[%c0_8, %c0_9] : memref<8x128xf32, #tpu.memory_space<vmem>>, vector<8x128xf32>
      %12 = arith.truncf %11 : vector<8x128xf32> to vector<8x128xbf16>
      %c0_10 = arith.constant 0 : index
      %c0_11 = arith.constant 0 : index
      %13 = vector.load %arg3[%c0_10, %c0_11] : memref<128x128xbf16, #tpu.memory_space<vmem>>, vector<128x128xbf16>
      %cst_12 = arith.constant dense<0.000000e+00> : vector<8x128xf32>
      %14 = tpu.matmul %12, %13, %cst_12 {dimension_numbers = #tpu.dot_dimension_numbers<[1], [0], [0], [1], [0, 0, 1, 1], [], []>} : vector<8x128xbf16>, vector<128x128xbf16>, vector<8x128xf32> -> vector<8x128xf32>
      %c0_13 = arith.constant 0 : index
      %c0_14 = arith.constant 0 : index
      %15 = vector.load %arg4[%c0_13, %c0_14] : memref<1x128xf32, #tpu.memory_space<vmem>>, vector<1x128xf32>
      %16 = vector.broadcast %15 : vector<1x128xf32> to vector<8x128xf32>
      %17 = arith.addf %14, %16 : vector<8x128xf32>
      %c0_15 = arith.constant 0 : index
      %c0_16 = arith.constant 0 : index
      %18 = vector.load %arg5[%c0_15, %c0_16] : memref<8x128xf32, #tpu.memory_space<vmem>>, vector<8x128xf32>
      tpu.vector_store %arg5[%c0_15, %c0_16], %17 {strides = array<i32>} : memref<8x128xf32, #tpu.memory_space<vmem>>, vector<8x128xf32>,
    } else {
    }
    return
  }
  func.func @transform_0(%arg0: i32, %arg1: i32) -> (i32, i32, i32) {
    %c0_i32 = arith.constant 0 : i32
    %c0_i32_0 = arith.constant 0 : i32
    return %arg0, %arg1, %c0_i32 : i32, i32, i32
  }
  func.func @transform_1(%arg0: i32, %arg1: i32) -> (i32, i32) {
    %c0_i32 = arith.constant 0 : i32
    %c0_i32_0 = arith.constant 0 : i32
    %c0_i32_1 = arith.constant 0 : i32
    return %c0_i32, %c0_i32_0 : i32, i32
  }
  func.func @transform_2(%arg0: i32, %arg1: i32) -> (i32, i32) {
    %c0_i32 = arith.constant 0 : i32
    %c0_i32_0 = arith.constant 0 : i32
    %c0_i32_1 = arith.constant 0 : i32
    return %c0_i32, %c0_i32_0 : i32, i32
  }
  func.func @transform_3(%arg0: i32, %arg1: i32) -> (i32, i32) {
    %c0_i32 = arith.constant 0 : i32
    %c0_i32_0 = arith.constant 0 : i32
    return %arg0, %c0_i32 : i32, i32
  }
}

</mosaic_0001>

<llo_original>
// kernel: tpu_custom_call.1
$region0: #{tpu_custom_call.1}
  #allocation0 [shape = 'u32[]', space=smem, size = 0x4, offset = 0x4, fixed_abs, tag = 'smem constant byte address 0x4 - core index']
  #allocation1 [shape = 'u32[144,128]{1,0:T(1,128)}', space=vmem, size = 0x12000, scoped, tag = 'internal scratch']
  #allocation2 [shape = 'f32[8,128]{1,0:T(8,128)}', space=vmem, size = 0x1000, scoped, tag = 'scratch operand']
  %s0 = inlined_call_operand.hbm [shape: f32[16,32,128], index: 0, kind: input, shape index: {}]
  %s1 = inlined_call_operand.hbm [shape: bf16[128,128], index: 1, kind: input, shape index: {}]
  %s2 = inlined_call_operand.vmem [shape: f32[1,128], index: 2, kind: input, shape index: {}]
  %s3 = inlined_call_operand.hbm [shape: f32[16,128], index: 3, kind: output, shape index: {}]
  %s4 = sld [smem:[#allocation0]]
  $region61: #{tpu_custom_call.1} parent=0
    _
  %s6 = ssub.s32 1, %s4
  %s7 = scalar_select 0, %s6, %s4
  $region1: #{tpu_custom_call.1} parent=0
    #allocation3 [shape = 'u8[65536]{0}', space=vmem, size = 0x10000, scoped, tag = 'input window, operand 0']
    #allocation4 [shape = 's32[2]{0}', space=sflag, size = 0x8, scoped, tag = 'scoped memory for tpu_custom_call.1']
    #allocation5 [shape = 's32[2]{0}', space=sflag, size = 0x8, scoped, tag = 'scoped memory for tpu_custom_call.1']
    #allocation6 [shape = 'u8[32768]{0}', space=vmem, size = 0x8000, scoped, tag = 'input window, operand 1, single buffered']
    #allocation7 [shape = 's32[1]{0}', space=sflag, size = 0x4, scoped, tag = 'scoped memory for tpu_custom_call.1']
    #allocation8 [shape = 'u8[8192]{0}', space=vmem, size = 0x2000, scoped, tag = 'output window, operand 0']
    %8 = vsyncpa [#allocation4], 0
    %s9 = scalar_lea.sflag [#allocation4], 1
    %10 = vsyncpa %s9, 0
    %11 = vsyncpa [#allocation7], 0
    %12 = vsyncpa [#allocation5], 0
    %s13 = scalar_lea.sflag [#allocation5], 1
    %14 = vsyncpa %s13, 0
    loop: start=0, step=1, limit=10
    $region2: #{tpu_custom_call.1} parent=1 // loop_pre_header
      _
    $region3: #{tpu_custom_call.1} parent=1 // loop_header
      %s16 = sphi 0, %s20
      %p17 = scmp.ge.s32.totalorder %s16, 10
      %s23 = sphi 0, %s35
      %s24 = sphi 0, %s31
      %s25 = sphi 0, %s23
      %s26 = sphi 0, %s24
      %s27 = sphi 0, %s25
      %s28 = sphi 0, %s26
      %s40 = sphi 0, %s42
      %s43 = sphi 0, %s40
      %s44 = sphi 0, %s43
      %s60 = sphi 0, %s44
      %s64 = sphi 0, %s64
      %s66 = sphi 0, %s64
      %s67 = sphi 0, %s66
      %s81 = sphi 0, %s67
      %s85 = sphi 0, %s85
      %s87 = sphi 0, %s85
      %s88 = sphi 0, %s87
      %s102 = sphi 0, %s88
      %s108 = sphi 0, %s110
      %s111 = sphi 0, %s108
      %s112 = sphi 0, %s111
      %s128 = sphi 0, %s112
    $region4: #{tpu_custom_call.1} parent=1 // loop_header_branch
      %19 = sbr.rel (%p17) target = $region8
    $region5: #{tpu_custom_call.1} parent=1 // loop_body
      %s21 = ssub.s32 %s16, 1
      %s22 = ssub.s32 %s16, 2
      %s29 = sadd.s32 1, %s24
      %p30 = scmp.ge.s32.totalorder %s29, 4
      %s31 = scalar_select %p30, 0, %s29
      %s32 = sadd.s32 1, %s23
      %s33 = scalar_select %p30, %s32, %s23
      %p34 = scmp.ge.s32.totalorder %s33, 2
      %s35 = scalar_select %p34, 0, %s33
      %s36 = ssub.s32 %s23, %s35
      %s37 = ssub.s32 %s24, %s31
      %s38 = sor.u32 %s36, %s37
      %p39 = scmp.eq.s32.totalorder %s38, 0
      %s41 = sadd.s32 %s40, 1
      %s42 = scalar_select %p39, %s40, %s41
      %p45 = pneg %p39
      %p46 = scmp.eq.s32.totalorder %s16, 7
      %p47 = por %p45, %p46
      %p48 = scmp.ne.s32.totalorder %s40, %s43
      %p49 = scmp.eq.s32.totalorder %s16, 0
      %p50 = por %p48, %p49
      %p51 = scmp.ne.s32.totalorder %s40, %s43
      %p52 = scmp.eq.s32.totalorder %s21, 7
      %p53 = por %p51, %p52
      %p54 = scmp.ne.s32.totalorder %s43, %s44
      %p55 = scmp.eq.s32.totalorder %s21, 0
      %p56 = por %p54, %p55
      %p57 = scmp.ne.s32.totalorder %s43, %s44
      %p58 = scmp.eq.s32.totalorder %s22, 7
      %p59 = por %p57, %p58
      %p61 = scmp.ne.s32.totalorder %s44, %s60
      %p62 = scmp.eq.s32.totalorder %s22, 0
      %p63 = por %p61, %p62
      %s65 = sadd.s32 %s64, 1
      %p68 = scmp.eq.s32.totalorder %s16, 7
      %p69 = scmp.ne.s32.totalorder %s64, %s66
      %p70 = scmp.eq.s32.totalorder %s16, 0
      %p71 = por %p69, %p70
      %p72 = scmp.ne.s32.totalorder %s64, %s66
      %p73 = scmp.eq.s32.totalorder %s21, 7
      %p74 = por %p72, %p73
      %p75 = scmp.ne.s32.totalorder %s66, %s67
      %p76 = scmp.eq.s32.totalorder %s21, 0
      %p77 = por %p75, %p76
      %p78 = scmp.ne.s32.totalorder %s66, %s67
      %p79 = scmp.eq.s32.totalorder %s22, 7
      %p80 = por %p78, %p79
      %p82 = scmp.ne.s32.totalorder %s67, %s81
      %p83 = scmp.eq.s32.totalorder %s22, 0
      %p84 = por %p82, %p83
      %s86 = sadd.s32 %s85, 1
      %p89 = scmp.eq.s32.totalorder %s16, 7
      %p90 = scmp.ne.s32.totalorder %s85, %s87
      %p91 = scmp.eq.s32.totalorder %s16, 0
      %p92 = por %p90, %p91
      %p93 = scmp.ne.s32.totalorder %s85, %s87
      %p94 = scmp.eq.s32.totalorder %s21, 7
      %p95 = por %p93, %p94
      %p96 = scmp.ne.s32.totalorder %s87, %s88
      %p97 = scmp.eq.s32.totalorder %s21, 0
      %p98 = por %p96, %p97
      %p99 = scmp.ne.s32.totalorder %s87, %s88
      %p100 = scmp.eq.s32.totalorder %s22, 7
      %p101 = por %p99, %p100
      %p103 = scmp.ne.s32.totalorder %s88, %s102
      %p104 = scmp.eq.s32.totalorder %s22, 0
      %p105 = por %p103, %p104
      %s106 = ssub.s32 %s23, %s35
      %p107 = scmp.eq.s32.totalorder %s106, 0
      %s109 = sadd.s32 %s108, 1
      %s110 = scalar_select %p107, %s108, %s109
      %p113 = pneg %p107
      %p114 = scmp.eq.s32.totalorder %s16, 7
      %p115 = por %p113, %p114
      %p116 = scmp.ne.s32.totalorder %s108, %s111
      %p117 = scmp.eq.s32.totalorder %s16, 0
      %p118 = por %p116, %p117
      %p119 = scmp.ne.s32.totalorder %s108, %s111
      %p120 = scmp.eq.s32.totalorder %s21, 7
      %p121 = por %p119, %p120
      %p122 = scmp.ne.s32.totalorder %s111, %s112
      %p123 = scmp.eq.s32.totalorder %s21, 0
      %p124 = por %p122, %p123
      %p125 = scmp.ne.s32.totalorder %s111, %s112
      %p126 = scmp.eq.s32.totalorder %s22, 7
      %p127 = por %p125, %p126
      %p129 = scmp.ne.s32.totalorder %s112, %s128
      %p130 = scmp.eq.s32.totalorder %s22, 0
      %p131 = por %p129, %p130
      %p132 = scmp.le.s32.totalorder 1, %s16
      %p133 = scmp.lt.s32.totalorder %s16, 9
      %p134 = pnand %p132, %p133
      %p135 = pneg %p134
      // Predicated region
      $region9: #{tpu_custom_call.1} parent=5 // pred_check
        _
      $region10: #{tpu_custom_call.1} parent=5 // pred_check_branch
        %137 = sbr.rel (%p134) target = $region12
      $region11: #{tpu_custom_call.1} parent=5 // pred_region
        %s138 = ssub.s32 %s16, 1
        // Predicated region
        $region13: #{tpu_custom_call.1} parent=11 // pred_check
          %p139 = pneg %p77
        $region14: #{tpu_custom_call.1} parent=11 // pred_check_branch
          %141 = sbr.rel (%p139) target = $region16
        $region15: #{tpu_custom_call.1} parent=11 // pred_region
          %s143 = ssub.s32 1024, 1024
          %144 = vsyncadd [#allocation7], %s143
          %s145 = sshll.u32 [#allocation6], 4
          %s146 = int_to_ptr.vmem [resolvable:$true] %s145
          %151 = dma.hbm_to_vmem [thread:$0]  %s1, 1024, %s146, [#allocation7], 64, 64, 4
        $region16: #{tpu_custom_call.1} parent=11 // pred_fallthru
          _
        // Predicated region
        $region17: #{tpu_custom_call.1} parent=11 // pred_check
          %p152 = pneg %p98
        $region18: #{tpu_custom_call.1} parent=11 // pred_check_branch
          %154 = sbr.rel (%p152) target = $region20
        $region19: #{tpu_custom_call.1} parent=11 // pred_region
          _
        $region20: #{tpu_custom_call.1} parent=11 // pred_fallthru
          _
      $region12: #{tpu_custom_call.1} parent=5 // pred_fallthru
        _
      %p155 = scmp.lt.s32.totalorder %s16, 8
      // Predicated region
      $region21: #{tpu_custom_call.1} parent=5 // pred_check
        %p156 = pneg %p155
      $region22: #{tpu_custom_call.1} parent=5 // pred_check_branch
        %158 = sbr.rel (%p156) target = $region24
      $region23: #{tpu_custom_call.1} parent=5 // pred_region
        // Predicated region
        $region25: #{tpu_custom_call.1} parent=23 // pred_check
          %p159 = pneg %p50
        $region26: #{tpu_custom_call.1} parent=23 // pred_check_branch
          %161 = sbr.rel (%p159) target = $region28
        $region27: #{tpu_custom_call.1} parent=23 // pred_region
          %s162 = sand.u32 %s40, 1
          %s163 = scalar_lea.sflag [#allocation4], %s162
          %s164 = sand.u32 %s40, 1
          %s165 = smul.addr %s164, 64
          %s166 = scalar_lea.vmem [#allocation3], %s165
          %s167 = smul.u32 8, %s23
          %s169 = ssub.s32 1024, 1024
          %170 = vsyncadd %s163, %s169
          %s171 = smul.addr %s167, 4
          %s172 = sadd.s32 %s24, %s171
          %s173 = smul.addr %s172, 128
          %s174 = scalar_lea.hbm %s0, %s173
          %s175 = sshll.u32 %s166, 4
          %s176 = int_to_ptr.vmem [resolvable:$true] %s175
          %181 = dma.hbm_to_vmem [thread:$0]  %s174, 1024, %s176, %s163, 512, 128, 8
        $region28: #{tpu_custom_call.1} parent=23 // pred_fallthru
          _
      $region24: #{tpu_custom_call.1} parent=5 // pred_fallthru
        _
      %p182 = scmp.le.s32.totalorder 1, %s16
      %p183 = scmp.lt.s32.totalorder %s16, 9
      %p184 = pnand %p182, %p183
      %p185 = pneg %p184
      // Predicated region
      $region29: #{tpu_custom_call.1} parent=5 // pred_check
        _
      $region30: #{tpu_custom_call.1} parent=5 // pred_check_branch
        %187 = sbr.rel (%p184) target = $region32
      $region31: #{tpu_custom_call.1} parent=5 // pred_region
        %s188 = ssub.s32 %s16, 1
        %s189 = sand.u32 %s43, 1
        %s190 = scalar_lea.sflag [#allocation4], %s189
        %s191 = sand.u32 %s43, 1
        %s192 = smul.addr %s191, 64
        %s193 = scalar_lea.vmem [#allocation3], %s192
        // Predicated region
        $region33: #{tpu_custom_call.1} parent=31 // pred_check
          %p194 = pneg %p56
        $region34: #{tpu_custom_call.1} parent=31 // pred_check_branch
          %196 = sbr.rel (%p194) target = $region36
        $region35: #{tpu_custom_call.1} parent=31 // pred_region
          %197 = dma.done %s190, 1024
        $region36: #{tpu_custom_call.1} parent=31 // pred_fallthru
          _
        // Predicated region
        $region37: #{tpu_custom_call.1} parent=31 // pred_check
          %p198 = pneg %p77
        $region38: #{tpu_custom_call.1} parent=31 // pred_check_branch
          %200 = sbr.rel (%p198) target = $region40
        $region39: #{tpu_custom_call.1} parent=31 // pred_region
          %201 = dma.done [#allocation7], 1024
        $region40: #{tpu_custom_call.1} parent=31 // pred_fallthru
          _
        %s202 = sand.u32 %s43, 1
        %s203 = scalar_lea.sflag [#allocation4], %s202
        %s204 = sand.u32 %s43, 1
        %s205 = smul.addr %s204, 64
        %s206 = scalar_lea.vmem [#allocation3], %s205
        %p207 = pneg %p56
        %p208 = pneg %p53
        %p209 = pneg %p77
        %p210 = pneg %p74
        %p211 = pneg %p98
        %p212 = pneg %p95
        %p213 = pneg %p124
        %p214 = pneg %p121
        %s215 = sand.u32 %s111, 1
        %s216 = scalar_lea.sflag [#allocation5], %s215
        %s217 = sand.u32 %s111, 1
        %s218 = smul.addr %s217, 8
        %s219 = scalar_lea.vmem [#allocation8], %s218
        %s220 = smul.u32 8, %s25
        %p222 = scmp.eq.s32.totalorder %s26, 0
        // Predicated region
        $region41: #{tpu_custom_call.1} parent=31 // pred_check
          %p223 = pneg %p222
        $region42: #{tpu_custom_call.1} parent=31 // pred_check_branch
          %225 = sbr.rel (%p223) target = $region44
        $region43: #{tpu_custom_call.1} parent=31 // pred_region
          %226 = vst [vmem:[#allocation2] sm:$0xff] 0.0
        $region44: #{tpu_custom_call.1} parent=31 // pred_fallthru
          _
        %v227 = vld [vmem:[#allocation2] sm:$0xff]
        %v228 = vld [vmem:[%s193] sm:$0xff]
        %v229 = vld [vmem:[%s193 + $0x8] sm:$0xff]
        %v230 = vld [vmem:[%s193 + $0x10] sm:$0xff]
        %v231 = vld [vmem:[%s193 + $0x18] sm:$0xff]
        %v232 = vld [vmem:[%s193 + $0x20] sm:$0xff]
        %v233 = vld [vmem:[%s193 + $0x28] sm:$0xff]
        %v234 = vld [vmem:[%s193 + $0x30] sm:$0xff]
        %v235 = vld [vmem:[%s193 + $0x38] sm:$0xff]
        %v236 = vrot.slane %v228, 4
        %v237 = vadd.f32 %v228, %v236
        %v238 = vrot.slane %v237, 2
        %v239 = vadd.f32 %v237, %v238
        %v240 = vrot.slane %v239, 1
        %v241 = vadd.f32 %v239, %v240
        %v242 = vrot.slane %v229, 4
        %v243 = vadd.f32 %v229, %v242
        %v244 = vrot.slane %v243, 2
        %v245 = vadd.f32 %v243, %v244
        %v246 = vrot.slane %v245, 1
        %v247 = vadd.f32 %v245, %v246
        %v248 = vrot.slane %v230, 4
        %v249 = vadd.f32 %v230, %v248
        %v250 = vrot.slane %v249, 2
        %v251 = vadd.f32 %v249, %v250
        %v252 = vrot.slane %v251, 1
        %v253 = vadd.f32 %v251, %v252
        %v254 = vrot.slane %v231, 4
        %v255 = vadd.f32 %v231, %v254
        %v256 = vrot.slane %v255, 2
        %v257 = vadd.f32 %v255, %v256
        %v258 = vrot.slane %v257, 1
        %v259 = vadd.f32 %v257, %v258
        %v260 = vrot.slane %v232, 4
        %v261 = vadd.f32 %v232, %v260
        %v262 = vrot.slane %v261, 2
        %v263 = vadd.f32 %v261, %v262
        %v264 = vrot.slane %v263, 1
        %v265 = vadd.f32 %v263, %v264
        %v266 = vrot.slane %v233, 4
        %v267 = vadd.f32 %v233, %v266
        %v268 = vrot.slane %v267, 2
        %v269 = vadd.f32 %v267, %v268
        %v270 = vrot.slane %v269, 1
        %v271 = vadd.f32 %v269, %v270
        %v272 = vrot.slane %v234, 4
        %v273 = vadd.f32 %v234, %v272
        %v274 = vrot.slane %v273, 2
        %v275 = vadd.f32 %v273, %v274
        %v276 = vrot.slane %v275, 1
        %v277 = vadd.f32 %v275, %v276
        %v278 = vrot.slane %v235, 4
        %v279 = vadd.f32 %v235, %v278
        %v280 = vrot.slane %v279, 2
        %v281 = vadd.f32 %v279, %v280
        %v282 = vrot.slane %v281, 1
        %v283 = vadd.f32 %v281, %v282
        %vm292 = vcmask 1041409
        %v293 = vsel %vm292, %v247, %v241
        %vm294 = vcmask 1042434
        %v295 = vsel %vm294, %v253, %v293
        %vm296 = vcmask 1043459
        %v297 = vsel %vm296, %v259, %v295
        %vm298 = vcmask 1044484
        %v299 = vsel %vm298, %v265, %v297
        %vm300 = vcmask 1045509
        %v301 = vsel %vm300, %v271, %v299
        %vm302 = vcmask 1046534
        %v303 = vsel %vm302, %v277, %v301
        %vm304 = vcmask 1047559
        %v305 = vsel %vm304, %v283, %v303
        %v307 = vadd.f32 %v227, %v305
        %308 = vst [vmem:[#allocation2] sm:$0xff] %v307
        %p309 = scmp.eq.s32.totalorder %s26, 3
        // Predicated region
        $region45: #{tpu_custom_call.1} parent=31 // pred_check
          %p310 = pneg %p309
        $region46: #{tpu_custom_call.1} parent=31 // pred_check_branch
          %312 = sbr.rel (%p310) target = $region48
        $region47: #{tpu_custom_call.1} parent=31 // pred_region
          %v313 = vld [vmem:[#allocation2] sm:$0xff]
          %v314 = vpack.c.bf16 %v313, %v313
          %v315 = vld [vmem:[#allocation6] sm:$0xf]
          %v316 = vld [vmem:[#allocation6 + $0x4] sm:$0xf]
          %v317 = vld [vmem:[#allocation6 + $0x8] sm:$0xf]
          %v318 = vld [vmem:[#allocation6 + $0xc] sm:$0xf]
          %v319 = vld [vmem:[#allocation6 + $0x10] sm:$0xf]
          %v320 = vld [vmem:[#allocation6 + $0x14] sm:$0xf]
          %v321 = vld [vmem:[#allocation6 + $0x18] sm:$0xf]
          %v322 = vld [vmem:[#allocation6 + $0x1c] sm:$0xf]
          %v323 = vld [vmem:[#allocation6 + $0x20] sm:$0xf]
          %v324 = vld [vmem:[#allocation6 + $0x24] sm:$0xf]
          %v325 = vld [vmem:[#allocation6 + $0x28] sm:$0xf]
          %v326 = vld [vmem:[#allocation6 + $0x2c] sm:$0xf]
          %v327 = vld [vmem:[#allocation6 + $0x30] sm:$0xf]
          %v328 = vld [vmem:[#allocation6 + $0x34] sm:$0xf]
          %v329 = vld [vmem:[#allocation6 + $0x38] sm:$0xf]
          %v330 = vld [vmem:[#allocation6 + $0x3c] sm:$0xf]
          %v331 = vld [vmem:[%s2] sm:$0x1]
          %v333 = vlaneseq
          %v334 = vshrl.u32 %v333, 7
          %v335 = vsub.s32 0, %v334
          %v336 = vrot.slane %v331, %v335
          %v354 = vunpack.c.l.b16 %v315
          %v355 = vunpack.c.l.b16 %v316
          %v356 = vunpack.c.l.b16 %v317
          %v357 = vunpack.c.l.b16 %v318
          %v358 = vunpack.c.l.b16 %v319
          %v359 = vunpack.c.l.b16 %v320
          %v360 = vunpack.c.l.b16 %v321
          %v361 = vunpack.c.l.b16 %v322
          %v362 = vunpack.c.l.b16 %v323
          %v363 = vunpack.c.l.b16 %v324
          %v364 = vunpack.c.l.b16 %v325
          %v365 = vunpack.c.l.b16 %v326
          %v366 = vunpack.c.l.b16 %v327
          %v367 = vunpack.c.l.b16 %v328
          %v368 = vunpack.c.l.b16 %v329
          %v369 = vunpack.c.l.b16 %v330
          %v370 = vpack.c.b16 %v355, %v354
          %v371 = vpack.c.b16 %v357, %v356
          %v372 = vpack.c.b16 %v359, %v358
          %v373 = vpack.c.b16 %v361, %v360
          %v374 = vpack.c.b16 %v363, %v362
          %v375 = vpack.c.b16 %v365, %v364
          %v376 = vpack.c.b16 %v367, %v366
          %v377 = vpack.c.b16 %v369, %v368
          %386 = vmatprep.subr.bf16.mxu0 0
          %387 = vmatpush1.bf16.msra.mxu0 %v377
          %388 = vmatprep.subr.bf16.mxu0 0
          %389 = vmatpush1.bf16.msra.mxu0 %v376
          %390 = vmatprep.subr.bf16.mxu0 0
          %391 = vmatpush1.bf16.msra.mxu0 %v375
          %392 = vmatprep.subr.bf16.mxu0 0
          %393 = vmatpush1.bf16.msra.mxu0 %v374
          %394 = vmatprep.subr.bf16.mxu0 0
          %395 = vmatpush1.bf16.msra.mxu0 %v373
          %396 = vmatprep.subr.bf16.mxu0 0
          %397 = vmatpush1.bf16.msra.mxu0 %v372
          %398 = vmatprep.subr.bf16.mxu0 0
          %399 = vmatpush1.bf16.msra.mxu0 %v371
          %400 = vmatprep.subr.bf16.mxu0 0
          %401 = vmatpush1.bf16.msra.mxu0 %v370
          %402 = vmatprep.subr.bf16.mxu0 0
          %403 = vmatpush2.bf16.msra.mxu0 0
          %404 = vmatprep.subr.bf16.mxu0 0
          %405 = vmatpush2.bf16.msra.mxu0 0
          %406 = vmatprep.subr.bf16.mxu0 0
          %407 = vmatpush2.bf16.msra.mxu0 0
          %408 = vmatprep.subr.bf16.mxu0 0
          %409 = vmatpush2.bf16.msra.mxu0 0
          %410 = vmatprep.subr.bf16.mxu0 0
          %411 = vmatpush2.bf16.msra.mxu0 0
          %412 = vmatprep.subr.bf16.mxu0 0
          %413 = vmatpush2.bf16.msra.mxu0 0
          %414 = vmatprep.subr.bf16.mxu0 0
          %415 = vmatpush2.bf16.msra.mxu0 0
          %416 = vmatprep.subr.bf16.mxu0 0
          %417 = vmatpush2.bf16.msra.mxu0 0
          %418 = vmatprep.mubr.bf16.mxu0 0
          %419 = vmatmul.mubr.bf16.gmra.mxu0 %v314
          %v420 = vpop.f32.mrf.mxu0
          %v421 = vadd.f32 %v336, %v420
          %v422 = vpop.f32.mrf.mxu0
          %v423 = vpop.f32.mrf.mxu0
          %v424 = vpop.f32.mrf.mxu0
          %425 = vdwg.mxu0
          %426 = vst [vmem:[%s219] sm:$0xff] %v421
        $region48: #{tpu_custom_call.1} parent=31 // pred_fallthru
          _
        %s427 = sand.u32 %s111, 1
        %s428 = scalar_lea.sflag [#allocation5], %s427
        %s429 = sand.u32 %s111, 1
        %s430 = smul.addr %s429, 8
        %s431 = scalar_lea.vmem [#allocation8], %s430
        // Predicated region
        $region49: #{tpu_custom_call.1} parent=31 // pred_check
          %p432 = pneg %p121
        $region50: #{tpu_custom_call.1} parent=31 // pred_check_branch
          %434 = sbr.rel (%p432) target = $region52
        $region51: #{tpu_custom_call.1} parent=31 // pred_region
          %s436 = ssub.s32 128, 128
          %437 = vsyncadd %s428, %s436
          %s438 = smul.addr %s25, 128
          %s439 = scalar_lea.hbm %s3, %s438
          %s441 = sshll.u32 %s431, 4
          %s442 = int_to_ptr.vmem [resolvable:$true] %s441
          %444 = dma.vmem_to_hbm [thread:$0]  %s442, 128, %s439, %s428
        $region52: #{tpu_custom_call.1} parent=31 // pred_fallthru
          _
      $region32: #{tpu_custom_call.1} parent=5 // pred_fallthru
        _
      %p445 = scmp.le.s32.totalorder 2, %s16
      // Predicated region
      $region53: #{tpu_custom_call.1} parent=5 // pred_check
        %p446 = pneg %p445
      $region54: #{tpu_custom_call.1} parent=5 // pred_check_branch
        %448 = sbr.rel (%p446) target = $region56
      $region55: #{tpu_custom_call.1} parent=5 // pred_region
        %s449 = ssub.s32 %s16, 2
        // Predicated region
        $region57: #{tpu_custom_call.1} parent=55 // pred_check
          %p450 = pneg %p127
        $region58: #{tpu_custom_call.1} parent=55 // pred_check_branch
          %452 = sbr.rel (%p450) target = $region60
        $region59: #{tpu_custom_call.1} parent=55 // pred_region
          %s453 = sand.u32 %s112, 1
          %s454 = scalar_lea.sflag [#allocation5], %s453
          %s455 = sand.u32 %s112, 1
          %s456 = smul.addr %s455, 8
          %s457 = scalar_lea.vmem [#allocation8], %s456
          %458 = dma.done %s454, 128
        $region60: #{tpu_custom_call.1} parent=55 // pred_fallthru
          _
      $region56: #{tpu_custom_call.1} parent=5 // pred_fallthru
        _
    $region6: #{tpu_custom_call.1} parent=1 // loop_footer
      %s20 = sadd.s32 1, %s16
    $region7: #{tpu_custom_call.1} parent=1 // loop_footer_branch
      %15 = sbr.rel target = $region3
    $region8: #{tpu_custom_call.1} parent=1 // loop_exit
      _
    %459 = vsyncpa [#allocation4], 1
    %s460 = scalar_lea.sflag [#allocation4], 1
    %461 = vsyncpa %s460, 1
    %462 = vsyncpa [#allocation7], 1
    %463 = vsyncpa [#allocation5], 1
    %s464 = scalar_lea.sflag [#allocation5], 1
    %465 = vsyncpa %s464, 1

</llo_original>
